<compile_context>
chip_gen: v5e
topology: v5e:2x2
jax: 0.10.0
libtpu: 0.0.40
codegen_flags: <defaults>
</compile_context>

<pallas_src>
import functools

import jax
import jax.numpy as jnp
from jax.experimental import pallas as pl
from jax.experimental.pallas import tpu as pltpu


def _criterion_kernel(pq_ref, tq_ref, mi_ref, pv_ref, tv_ref,
                      msum_out, mcnt_out, soft_out, misum_out, mse_out,
                      msum_acc, mcnt_acc, soft_acc, misum_acc, mse_acc,
                      *, bt, q, pv_block, steps, total_b):
    c = pl.program_id(0)          # core / split index ("parallel")
    i = pl.program_id(1)          # reduction step within the split ("arbitrary")

    @pl.when(i == 0)
    def _init():
        msum_acc[...] = jnp.zeros_like(msum_acc)
        mcnt_acc[...] = jnp.zeros_like(mcnt_acc)
        soft_acc[...] = jnp.zeros_like(soft_acc)
        misum_acc[...] = jnp.zeros_like(misum_acc)
        mse_acc[...] = jnp.zeros_like(mse_acc)

    # Promote to f32 on the VMEM-resident tile (inputs arrive in native dtype).
    pq = pq_ref[...].astype(jnp.float32)      # [bt, Q] predicted logits
    tq = tq_ref[...].astype(jnp.float32)      # [bt, Q] target quality vector
    mi = mi_ref[...]                          # [bt, 1] int32 matching index
    pv = pv_ref[...].astype(jnp.float32)      # [1, pv_block] predicted value
    tv = tv_ref[...].astype(jnp.float32)      # [1, pv_block] target value

    # Global row offset of this tile.  Rows >= total_b belong to the partial
    # edge block and are excluded with jnp.where (never multiplied), so any
    # garbage / Inf / NaN in the out-of-bounds region cannot leak into sums.
    row0 = (c * steps + i) * bt
    row_ids = row0 + jax.lax.broadcasted_iota(jnp.int32, (bt, 1), 0)
    valid = row_ids < total_b                                         # [bt,1]

    col_iota = jax.lax.broadcasted_iota(jnp.int32, (bt, q), 1)

    # ---- row-wise logsumexp of logits (stable softmax denominator) ----
    row_max = jnp.max(pq, axis=1, keepdims=True)                      # [bt,1]
    lse = row_max + jnp.log(jnp.sum(jnp.exp(pq - row_max),
                                    axis=1, keepdims=True))           # [bt,1]
    lse_minus_pq = lse - pq                                           # -log_softmax

    # ---- argmax(target_quality_vec, 1), first occurrence (torch.argmax) ----
    t_max = jnp.max(tq, axis=1, keepdims=True)
    label = jnp.min(jnp.where(tq == t_max, col_iota, q),
                    axis=1, keepdims=True)                            # [bt,1]

    # hit[r, c] true on exactly the (row, argmax-column) pairs surviving the
    # mask (argmax(target) == matching_idx) restricted to real rows.
    hit = (col_iota == label) & (label == mi) & valid                 # [bt,Q]

    # Column-wise partial sums: the axis-0 reduce is vreg adds on the VPU;
    # the cross-lane reduce to scalars is deferred to the finalize step.
    msum_acc[...] += jnp.sum(jnp.where(hit, lse_minus_pq, 0.0),
                             axis=0, keepdims=True)                   # [1,Q]
    mcnt_acc[...] += jnp.sum(jnp.where(hit, 1.0, 0.0),
                             axis=0, keepdims=True)                   # [1,Q]
    soft_acc[...] += jnp.sum(jnp.where(valid, tq * lse_minus_pq, 0.0),
                             axis=0, keepdims=True)                   # [1,Q]
    # Exact int32 sum of matching_idx (only its sign is ever used).
    misum_acc[...] += jnp.sum(jnp.where(valid, mi, 0), keepdims=True)

    # ---- board value MSE, lane-dense; elementwise accumulate, reduce last ----
    lane0 = (c * steps + i) * pv_block
    lane_ids = lane0 + jax.lax.broadcasted_iota(jnp.int32, (1, pv_block), 1)
    lvalid = lane_ids < total_b
    diff = jnp.tanh(pv) - tv
    mse_acc[...] += jnp.where(lvalid, diff * diff, 0.0)

    @pl.when(i == pl.num_programs(1) - 1)
    def _finalize():
        # One cross-lane reduce per quantity per core; broadcast-write a full
        # (8,128) block so the output store is lane-dense and unmasked.
        msum_out[...] = jnp.full((1, 8, 128), jnp.sum(msum_acc[...]), jnp.float32)
        mcnt_out[...] = jnp.full((1, 8, 128), jnp.sum(mcnt_acc[...]), jnp.float32)
        soft_out[...] = jnp.full((1, 8, 128), jnp.sum(soft_acc[...]), jnp.float32)
        misum_out[...] = jnp.full((1, 8, 128), jnp.sum(misum_acc[...]), jnp.int32)
        mse_out[...] = jnp.full((1, 8, 128), jnp.sum(mse_acc[...]), jnp.float32)


def _round_up(x, m):
    return ((x + m - 1) // m) * m


def _tpu_vmem_bytes():
    try:
        return int(pltpu.get_tpu_info().vmem_capacity_bytes)
    except Exception:
        return 128 * 1024 * 1024


def _plan_tiles(batch, q, itemsize, vmem_bytes):
    """Pick (row_tile, core_splits, steps_per_split).

    The row tile is sized from (a) a per-step HBM byte target that amortizes
    the ~0.35us grid-step overhead and (b) a VMEM budget that accounts for the
    lane-padding of the (bt, Q) layout when Q << 128.
    """
    # v7x: 64 MiB VMEM but 3.2 TB/s HBM -> larger per-step target.
    small_vmem = vmem_bytes <= 64 * 1024 * 1024
    step_bytes_target = (8 if small_vmem else 4) * 1024 * 1024
    row_hbm_bytes = max(1, 2 * q * itemsize)                # pq + tq per row
    cap_traffic = step_bytes_target // row_hbm_bytes

    # VMEM per row: every (bt, Q)/(bt, 1) buffer or temporary is lane-padded to
    # 128 lanes (~512 B/row f32).  2x double-buffered pq/tq + mi + ~8 live temps.
    lane_pad_bytes = 4 * 128 * ((q + 127) // 128)
    per_row_vmem = 4 * lane_pad_bytes + 2 * 512 + 8 * lane_pad_bytes
    cap_vmem = int(0.45 * vmem_bytes) // per_row_vmem

    cap = max(128, min(cap_traffic, cap_vmem, 8192))
    cap = (cap // 128) * 128

    if batch <= cap:
        return _round_up(batch, 8), 1, 1
    bt = cap
    num_tiles = pl.cdiv(batch, bt)
    splits = 2 if num_tiles % 2 == 0 else 1   # two TensorCores on v7x
    return bt, splits, num_tiles // splits


def criterion_forward(pred_quality_vec, pred_value, target_quality_vec,
                      target_value, matching_idx,
                      losses=("loss_quality", "loss_board_value")):
    """JAX/Pallas equivalent of Criterion.forward (no output_aux)."""
    B, Q = pred_quality_vec.shape
    pq = pred_quality_vec                     # native dtype straight to the kernel
    tq = target_quality_vec
    assert int(pred_value.size) == B and int(target_value.size) == B
    pv = pred_value.reshape(1, B)             # lane-dense board values
    tv = target_value.reshape(1, B)
    mi = matching_idx.reshape(B, 1).astype(jnp.int32)

    vmem_bytes = _tpu_vmem_bytes()
    itemsize = max(pq.dtype.itemsize, tq.dtype.itemsize)
    bt, splits, steps = _plan_tiles(B, Q, itemsize, vmem_bytes)
    num_tiles = splits * steps
    pv_block = B if num_tiles == 1 else bt    # (1, pv_block) obeys the lane rule

    kernel = functools.partial(_criterion_kernel, bt=bt, q=Q,
                               pv_block=pv_block, steps=steps, total_b=B)

    part_f = jax.ShapeDtypeStruct((splits, 8, 128), jnp.float32)
    part_i = jax.ShapeDtypeStruct((splits, 8, 128), jnp.int32)
    part_spec = pl.BlockSpec((1, 8, 128), lambda c, i: (c, 0, 0))

    row_map = lambda c, i: (c * steps + i, 0)
    val_map = lambda c, i: (0, c * steps + i)

    bytes_accessed = int(pq.size * pq.dtype.itemsize
                         + tq.size * tq.dtype.itemsize
                         + pv.size * pv.dtype.itemsize
                         + tv.size * tv.dtype.itemsize
                         + mi.size * 4 + 5 * splits * 8 * 128 * 4)
    cost = pl.CostEstimate(flops=12 * B * Q + 10 * B,
                           transcendentals=B * Q + 2 * B,
                           bytes_accessed=bytes_accessed)

    outs = pl.pallas_call(
        kernel,
        out_shape=(part_f, part_f, part_f, part_i, part_f),
        grid=(splits, steps),
        in_specs=[
            pl.BlockSpec((bt, Q), row_map),         # pred_quality_vec
            pl.BlockSpec((bt, Q), row_map),         # target_quality_vec
            pl.BlockSpec((bt, 1), row_map),         # matching_idx
            pl.BlockSpec((1, pv_block), val_map),   # pred_value (lane-dense)
            pl.BlockSpec((1, pv_block), val_map),   # target_value (lane-dense)
        ],
        out_specs=(part_spec,) * 5,
        scratch_shapes=[
            pltpu.VMEM((1, Q), jnp.float32),          # masked-CE column partials
            pltpu.VMEM((1, Q), jnp.float32),          # mask-count column partials
            pltpu.VMEM((1, Q), jnp.float32),          # soft-CE column partials
            pltpu.VMEM((1, 1), jnp.int32),            # exact sum(matching_idx)
            pltpu.VMEM((1, pv_block), jnp.float32),   # MSE lane partials
        ],
        compiler_params=pltpu.CompilerParams(
            dimension_semantics=("parallel", "arbitrary"),
            vmem_limit_bytes=min(int(0.7 * vmem_bytes), 100 * 1024 * 1024),
        ),
        cost_estimate=cost,
    )(pq, tq, mi, pv, tv)

    msum_p, mcnt_p, soft_p, misum_p, mse_p = outs
    msum = jnp.sum(msum_p[:, 0, 0])
    mcnt = jnp.sum(mcnt_p[:, 0, 0])
    soft = jnp.sum(soft_p[:, 0, 0])
    misum = jnp.sum(misum_p[:, 0, 0])         # exact int32 -> sign test is safe
    mse = jnp.sum(mse_p[:, 0, 0])

    # ~10-op finalize in the wrapper (fuses into the surrounding XLA graph).
    inv_b = jnp.float32(1.0 / B)
    masked_ce = jnp.where(mcnt > 0.0, msum / jnp.maximum(mcnt, 1.0),
                          jnp.float32(0.0))             # empty mask (NaN) -> 0
    loss_quality = jnp.where(misum < 0, soft * inv_b, masked_ce)
    loss_board_value = mse * inv_b

    out = {}
    for loss in losses:
        if loss == "loss_quality":
            out["loss_quality"] = loss_quality
        elif loss == "loss_board_value":
            out["loss_board_value"] = loss_board_value
        else:
            raise AssertionError(f"do you really want to compute {loss} loss?")
    # TODO(synk): output_aux branch is plain Python fan-out over the same
    # kernel; omitted here since no aux heads are constructed in this script.
    return out


if __name__ == "__main__":
    key = jax.random.PRNGKey(0)
    k1, k2, k3, k4, k5 = jax.random.split(key, 5)

    B, Q = 8, 16
    pred_quality_vec = jax.random.normal(k1, (B, Q), dtype=jnp.float32)
    target_quality_vec = jax.random.normal(k2, (B, Q), dtype=jnp.float32)
    pred_value = jax.random.normal(k3, (B, 1), dtype=jnp.float32)
    target_value = jnp.tanh(jax.random.normal(k4, (B, 1), dtype=jnp.float32))
    # make roughly half of the rows match their target-argmax so the masked CE
    # path is exercised
    true_argmax = jnp.argmax(target_quality_vec, axis=1).astype(jnp.int32)
    rand_idx = jax.random.randint(k5, (B,), 0, Q, dtype=jnp.int32)
    matching_idx = jnp.where(jnp.arange(B) % 2 == 0, true_argmax, rand_idx)

    losses = criterion_forward(pred_quality_vec, pred_value,
                               target_quality_vec, target_value, matching_idx)
    jax.block_until_ready(losses)

    # ---- sanity check: masked hard-label CE branch ----
    lse = jax.nn.logsumexp(pred_quality_vec, axis=1)
    lbl = jnp.argmax(target_quality_vec, axis=1)
    per_row = lse - pred_quality_vec[jnp.arange(B), lbl]
    m = (lbl == matching_idx)
    ref_q = jnp.where(m.sum() > 0, (per_row * m).sum() / jnp.maximum(m.sum(), 1), 0.0)
    ref_bv = jnp.mean((jnp.tanh(pred_value) - target_value) ** 2)
    assert jnp.allclose(losses["loss_quality"], ref_q, atol=1e-5)
    assert jnp.allclose(losses["loss_board_value"], ref_bv, atol=1e-6)

    # ---- sanity check: soft-target CE branch (sum(matching_idx) < 0) ----
    neg_idx = -jnp.ones((B,), dtype=jnp.int32)
    losses_soft = criterion_forward(pred_quality_vec, pred_value,
                                    target_quality_vec, target_value, neg_idx)
    jax.block_until_ready(losses_soft)
    logp = jax.nn.log_softmax(pred_quality_vec, axis=1)
    ref_soft = -(target_quality_vec * logp).sum(axis=1).mean()
    assert jnp.allclose(losses_soft["loss_quality"], ref_soft, atol=1e-5)
    assert jnp.allclose(losses_soft["loss_board_value"], ref_bv, atol=1e-6)

    print("KERNEL_OK")
</pallas_src>

<mosaic_0001>
module attributes {stable_mosaic.version = 11 : i64} {
  func.func @_criterion_kernel(%arg0: i32, %arg1: i32, %arg2: memref<8x16xf32, #tpu.memory_space<vmem>>, %arg3: memref<8x16xf32, #tpu.memory_space<vmem>>, %arg4: memref<8x1xi32, #tpu.memory_space<vmem>>, %arg5: memref<1x8xf32, #tpu.memory_space<vmem>>, %arg6: memref<1x8xf32, #tpu.memory_space<vmem>>, %arg7: memref<1x8x128xf32, #tpu.memory_space<vmem>>, %arg8: memref<1x8x128xf32, #tpu.memory_space<vmem>>, %arg9: memref<1x8x128xf32, #tpu.memory_space<vmem>>, %arg10: memref<1x8x128xi32, #tpu.memory_space<vmem>>, %arg11: memref<1x8x128xf32, #tpu.memory_space<vmem>>, %arg12: memref<1x16xf32, #tpu.memory_space<vmem>>, %arg13: memref<1x16xf32, #tpu.memory_space<vmem>>, %arg14: memref<1x16xf32, #tpu.memory_space<vmem>>, %arg15: memref<1x1xi32, #tpu.memory_space<vmem>>, %arg16: memref<1x8xf32, #tpu.memory_space<vmem>>) attributes {dimension_semantics = [#tpu.dimension_semantics<parallel>, #tpu.dimension_semantics<arbitrary>], iteration_bounds = array<i64: 1, 1>, scalar_prefetch = 0 : i64, scratch_operands = 5 : i64, tpu.core_type = #tpu.core_type<tc>, window_params = [{transform_indices = @transform_0, window_bounds = array<i64: 8, 16>}, {transform_indices = @transform_1, window_bounds = array<i64: 8, 16>}, {transform_indices = @transform_2, window_bounds = array<i64: 8, 1>}, {transform_indices = @transform_3, window_bounds = array<i64: 1, 8>}, {transform_indices = @transform_4, window_bounds = array<i64: 1, 8>}, {transform_indices = @transform_5, window_bounds = array<i64: 1, 8, 128>}, {transform_indices = @transform_6, window_bounds = array<i64: 1, 8, 128>}, {transform_indices = @transform_7, window_bounds = array<i64: 1, 8, 128>}, {transform_indices = @transform_8, window_bounds = array<i64: 1, 8, 128>}, {transform_indices = @transform_9, window_bounds = array<i64: 1, 8, 128>}]} {
    %c0_i32 = arith.constant 0 : i32
    %0 = arith.cmpi eq, %arg1, %c0_i32 : i32
    %1 = arith.extui %0 : i1 to i32
    %c0_i32_0 = arith.constant 0 : i32
    %2 = arith.cmpi ne, %1, %c0_i32_0 : i32
    scf.if %2 {
      %cst_49 = arith.constant 0.000000e+00 : f32
      %97 = vector.broadcast %cst_49 : f32 to vector<1x16xf32>
      %c0_50 = arith.constant 0 : index
      %c0_51 = arith.constant 0 : index
      %98 = vector.load %arg12[%c0_50, %c0_51] : memref<1x16xf32, #tpu.memory_space<vmem>>, vector<1x16xf32>
      tpu.vector_store %arg12[%c0_50, %c0_51], %97 {strides = array<i32>} : memref<1x16xf32, #tpu.memory_space<vmem>>, vector<1x16xf32>,
      %cst_52 = arith.constant 0.000000e+00 : f32
      %99 = vector.broadcast %cst_52 : f32 to vector<1x16xf32>
      %c0_53 = arith.constant 0 : index
      %c0_54 = arith.constant 0 : index
      %100 = vector.load %arg13[%c0_53, %c0_54] : memref<1x16xf32, #tpu.memory_space<vmem>>, vector<1x16xf32>
      tpu.vector_store %arg13[%c0_53, %c0_54], %99 {strides = array<i32>} : memref<1x16xf32, #tpu.memory_space<vmem>>, vector<1x16xf32>,
      %cst_55 = arith.constant 0.000000e+00 : f32
      %101 = vector.broadcast %cst_55 : f32 to vector<1x16xf32>
      %c0_56 = arith.constant 0 : index
      %c0_57 = arith.constant 0 : index
      %102 = vector.load %arg14[%c0_56, %c0_57] : memref<1x16xf32, #tpu.memory_space<vmem>>, vector<1x16xf32>
      tpu.vector_store %arg14[%c0_56, %c0_57], %101 {strides = array<i32>} : memref<1x16xf32, #tpu.memory_space<vmem>>, vector<1x16xf32>,
      %c0_i32_58 = arith.constant 0 : i32
      %103 = vector.broadcast %c0_i32_58 : i32 to vector<1x1xi32>
      %c0_59 = arith.constant 0 : index
      %c0_60 = arith.constant 0 : index
      %104 = vector.load %arg15[%c0_59, %c0_60] : memref<1x1xi32, #tpu.memory_space<vmem>>, vector<1x1xi32>
      tpu.vector_store %arg15[%c0_59, %c0_60], %103 {strides = array<i32>} : memref<1x1xi32, #tpu.memory_space<vmem>>, vector<1x1xi32>,
      %cst_61 = arith.constant 0.000000e+00 : f32
      %105 = vector.broadcast %cst_61 : f32 to vector<1x8xf32>
      %c0_62 = arith.constant 0 : index
      %c0_63 = arith.constant 0 : index
      %106 = vector.load %arg16[%c0_62, %c0_63] : memref<1x8xf32, #tpu.memory_space<vmem>>, vector<1x8xf32>
      tpu.vector_store %arg16[%c0_62, %c0_63], %105 {strides = array<i32>} : memref<1x8xf32, #tpu.memory_space<vmem>>, vector<1x8xf32>,
    } else {
    }
    %c0 = arith.constant 0 : index
    %c0_1 = arith.constant 0 : index
    %3 = vector.load %arg2[%c0, %c0_1] : memref<8x16xf32, #tpu.memory_space<vmem>>, vector<8x16xf32>
    %c0_2 = arith.constant 0 : index
    %c0_3 = arith.constant 0 : index
    %4 = vector.load %arg3[%c0_2, %c0_3] : memref<8x16xf32, #tpu.memory_space<vmem>>, vector<8x16xf32>
    %c0_4 = arith.constant 0 : index
    %c0_5 = arith.constant 0 : index
    %5 = vector.load %arg4[%c0_4, %c0_5] : memref<8x1xi32, #tpu.memory_space<vmem>>, vector<8x1xi32>
    %c0_6 = arith.constant 0 : index
    %c0_7 = arith.constant 0 : index
    %6 = vector.load %arg5[%c0_6, %c0_7] : memref<1x8xf32, #tpu.memory_space<vmem>>, vector<1x8xf32>
    %c0_8 = arith.constant 0 : index
    %c0_9 = arith.constant 0 : index
    %7 = vector.load %arg6[%c0_8, %c0_9] : memref<1x8xf32, #tpu.memory_space<vmem>>, vector<1x8xf32>
    %c1_i32 = arith.constant 1 : i32
    %8 = arith.muli %arg0, %c1_i32 : i32
    %9 = arith.addi %8, %arg1 : i32
    %c8_i32 = arith.constant 8 : i32
    %10 = arith.muli %9, %c8_i32 : i32
    %11 = tpu.iota {dimensions = array<i32: 0>} : vector<8x1xi32>
    %12 = vector.broadcast %10 : i32 to vector<8x1xi32>
    %13 = arith.addi %12, %11 : vector<8x1xi32>
    %c8_i32_10 = arith.constant 8 : i32
    %14 = vector.broadcast %c8_i32_10 : i32 to vector<8x1xi32>
    %15 = arith.cmpi slt, %13, %14 : vector<8x1xi32>
    %16 = tpu.iota {dimensions = array<i32: 1>} : vector<8x16xi32>
    %cst = arith.constant dense<0xFF800000> : vector<8xf32>
    %17 = vector.multi_reduction <maximumf>, %3, %cst [1] : vector<8x16xf32> to vector<8xf32>
    %18 = vector.shape_cast %17 : vector<8xf32> to vector<8x1xf32>
    %19 = vector.broadcast %18 : vector<8x1xf32> to vector<8x16xf32>
    %20 = arith.subf %3, %19 : vector<8x16xf32>
    %21 = math.exp %20 : vector<8x16xf32>
    %cst_11 = arith.constant dense<0.000000e+00> : vector<8xf32>
    %22 = vector.multi_reduction <add>, %21, %cst_11 [1] : vector<8x16xf32> to vector<8xf32>
    %23 = vector.shape_cast %22 : vector<8xf32> to vector<8x1xf32>
    %24 = math.log %23 : vector<8x1xf32>
    %25 = arith.addf %18, %24 : vector<8x1xf32>
    %26 = vector.broadcast %25 : vector<8x1xf32> to vector<8x16xf32>
    %27 = arith.subf %26, %3 : vector<8x16xf32>
    %cst_12 = arith.constant dense<0xFF800000> : vector<8xf32>
    %28 = vector.multi_reduction <maximumf>, %4, %cst_12 [1] : vector<8x16xf32> to vector<8xf32>
    %29 = vector.shape_cast %28 : vector<8xf32> to vector<8x1xf32>
    %30 = vector.broadcast %29 : vector<8x1xf32> to vector<8x16xf32>
    %31 = arith.cmpf oeq, %4, %30 : vector<8x16xf32>
    %c16_i32 = arith.constant 16 : i32
    %32 = vector.broadcast %c16_i32 : i32 to vector<8x16xi32>
    %33 = arith.select %31, %16, %32 : vector<8x16xi1>, vector<8x16xi32>
    %cst_13 = arith.constant dense<2147483647> : vector<8xi32>
    %34 = vector.multi_reduction <minsi>, %33, %cst_13 [1] : vector<8x16xi32> to vector<8xi32>
    %35 = vector.shape_cast %34 : vector<8xi32> to vector<8x1xi32>
    %36 = vector.broadcast %35 : vector<8x1xi32> to vector<8x16xi32>
    %37 = arith.cmpi eq, %16, %36 : vector<8x16xi32>
    %38 = arith.cmpi eq, %35, %5 : vector<8x1xi32>
    %39 = vector.broadcast %38 : vector<8x1xi1> to vector<8x16xi1>
    %40 = arith.andi %37, %39 : vector<8x16xi1>
    %41 = vector.broadcast %15 : vector<8x1xi1> to vector<8x16xi1>
    %42 = arith.andi %40, %41 : vector<8x16xi1>
    %c0_14 = arith.constant 0 : index
    %c0_15 = arith.constant 0 : index
    %43 = vector.load %arg12[%c0_14, %c0_15] : memref<1x16xf32, #tpu.memory_space<vmem>>, vector<1x16xf32>
    %cst_16 = arith.constant 0.000000e+00 : f32
    %44 = vector.broadcast %cst_16 : f32 to vector<8x16xf32>
    %45 = arith.select %42, %27, %44 : vector<8x16xi1>, vector<8x16xf32>
    %cst_17 = arith.constant dense<0.000000e+00> : vector<16xf32>
    %46 = vector.multi_reduction <add>, %45, %cst_17 [0] : vector<8x16xf32> to vector<16xf32>
    %47 = vector.shape_cast %46 : vector<16xf32> to vector<1x16xf32>
    %48 = arith.addf %43, %47 : vector<1x16xf32>
    %c0_18 = arith.constant 0 : index
    %c0_19 = arith.constant 0 : index
    %49 = vector.load %arg12[%c0_18, %c0_19] : memref<1x16xf32, #tpu.memory_space<vmem>>, vector<1x16xf32>
    tpu.vector_store %arg12[%c0_18, %c0_19], %48 {strides = array<i32>} : memref<1x16xf32, #tpu.memory_space<vmem>>, vector<1x16xf32>,
    %c0_20 = arith.constant 0 : index
    %c0_21 = arith.constant 0 : index
    %50 = vector.load %arg13[%c0_20, %c0_21] : memref<1x16xf32, #tpu.memory_space<vmem>>, vector<1x16xf32>
    %cst_22 = arith.constant 1.000000e+00 : f32
    %cst_23 = arith.constant 0.000000e+00 : f32
    %51 = vector.broadcast %cst_22 : f32 to vector<8x16xf32>
    %52 = vector.broadcast %cst_23 : f32 to vector<8x16xf32>
    %53 = arith.select %42, %51, %52 : vector<8x16xi1>, vector<8x16xf32>
    %cst_24 = arith.constant dense<0.000000e+00> : vector<16xf32>
    %54 = vector.multi_reduction <add>, %53, %cst_24 [0] : vector<8x16xf32> to vector<16xf32>
    %55 = vector.shape_cast %54 : vector<16xf32> to vector<1x16xf32>
    %56 = arith.addf %50, %55 : vector<1x16xf32>
    %c0_25 = arith.constant 0 : index
    %c0_26 = arith.constant 0 : index
    %57 = vector.load %arg13[%c0_25, %c0_26] : memref<1x16xf32, #tpu.memory_space<vmem>>, vector<1x16xf32>
    tpu.vector_store %arg13[%c0_25, %c0_26], %56 {strides = array<i32>} : memref<1x16xf32, #tpu.memory_space<vmem>>, vector<1x16xf32>,
    %c0_27 = arith.constant 0 : index
    %c0_28 = arith.constant 0 : index
    %58 = vector.load %arg14[%c0_27, %c0_28] : memref<1x16xf32, #tpu.memory_space<vmem>>, vector<1x16xf32>
    %59 = arith.mulf %4, %27 : vector<8x16xf32>
    %cst_29 = arith.constant 0.000000e+00 : f32
    %60 = vector.shape_cast %15 : vector<8x1xi1> to vector<8x1xi1>
    %61 = vector.broadcast %60 : vector<8x1xi1> to vector<8x16xi1>
    %62 = vector.broadcast %cst_29 : f32 to vector<8x16xf32>
    %63 = arith.select %61, %59, %62 : vector<8x16xi1>, vector<8x16xf32>
    %cst_30 = arith.constant dense<0.000000e+00> : vector<16xf32>
    %64 = vector.multi_reduction <add>, %63, %cst_30 [0] : vector<8x16xf32> to vector<16xf32>
    %65 = vector.shape_cast %64 : vector<16xf32> to vector<1x16xf32>
    %66 = arith.addf %58, %65 : vector<1x16xf32>
    %c0_31 = arith.constant 0 : index
    %c0_32 = arith.constant 0 : index
    %67 = vector.load %arg14[%c0_31, %c0_32] : memref<1x16xf32, #tpu.memory_space<vmem>>, vector<1x16xf32>
    tpu.vector_store %arg14[%c0_31, %c0_32], %66 {strides = array<i32>} : memref<1x16xf32, #tpu.memory_space<vmem>>, vector<1x16xf32>,
    %c0_33 = arith.constant 0 : index
    %c0_34 = arith.constant 0 : index
    %68 = vector.load %arg15[%c0_33, %c0_34] : memref<1x1xi32, #tpu.memory_space<vmem>>, vector<1x1xi32>
    %c0_i32_35 = arith.constant 0 : i32
    %69 = vector.broadcast %c0_i32_35 : i32 to vector<8x1xi32>
    %70 = arith.select %15, %5, %69 : vector<8x1xi1>, vector<8x1xi32>
    %71 = vector.shape_cast %70 : vector<8x1xi32> to vector<1x8x1xi32>
    %cst_36 = arith.constant dense<0> : vector<1xi32>
    %72 = vector.multi_reduction <add>, %71, %cst_36 [1, 2] : vector<1x8x1xi32> to vector<1xi32>
    %73 = vector.shape_cast %72 : vector<1xi32> to vector<1x1x1xi32>
    %74 = vector.extract %73[0, 0, 0] : i32 from vector<1x1x1xi32>
    %75 = vector.broadcast %74 : i32 to vector<1x1xi32>
    %76 = arith.addi %68, %75 : vector<1x1xi32>
    %c0_37 = arith.constant 0 : index
    %c0_38 = arith.constant 0 : index
    %77 = vector.load %arg15[%c0_37, %c0_38] : memref<1x1xi32, #tpu.memory_space<vmem>>, vector<1x1xi32>
    tpu.vector_store %arg15[%c0_37, %c0_38], %76 {strides = array<i32>} : memref<1x1xi32, #tpu.memory_space<vmem>>, vector<1x1xi32>,
    %c1_i32_39 = arith.constant 1 : i32
    %78 = arith.muli %arg0, %c1_i32_39 : i32
    %79 = arith.addi %78, %arg1 : i32
    %c8_i32_40 = arith.constant 8 : i32
    %80 = arith.muli %79, %c8_i32_40 : i32
    %81 = tpu.iota {dimensions = array<i32: 1>} : vector<1x8xi32>
    %82 = vector.broadcast %80 : i32 to vector<1x8xi32>
    %83 = arith.addi %82, %81 : vector<1x8xi32>
    %c8_i32_41 = arith.constant 8 : i32
    %84 = vector.broadcast %c8_i32_41 : i32 to vector<1x8xi32>
    %85 = arith.cmpi slt, %83, %84 : vector<1x8xi32>
    %86 = math.tanh %6 : vector<1x8xf32>
    %87 = arith.subf %86, %7 : vector<1x8xf32>
    %c0_42 = arith.constant 0 : index
    %c0_43 = arith.constant 0 : index
    %88 = vector.load %arg16[%c0_42, %c0_43] : memref<1x8xf32, #tpu.memory_space<vmem>>, vector<1x8xf32>
    %89 = arith.mulf %87, %87 : vector<1x8xf32>
    %cst_44 = arith.constant 0.000000e+00 : f32
    %90 = vector.broadcast %cst_44 : f32 to vector<1x8xf32>
    %91 = arith.select %85, %89, %90 : vector<1x8xi1>, vector<1x8xf32>
    %92 = arith.addf %88, %91 : vector<1x8xf32>
    %c0_45 = arith.constant 0 : index
    %c0_46 = arith.constant 0 : index
    %93 = vector.load %arg16[%c0_45, %c0_46] : memref<1x8xf32, #tpu.memory_space<vmem>>, vector<1x8xf32>
    tpu.vector_store %arg16[%c0_45, %c0_46], %92 {strides = array<i32>} : memref<1x8xf32, #tpu.memory_space<vmem>>, vector<1x8xf32>,
    %c0_i32_47 = arith.constant 0 : i32
    %94 = arith.cmpi eq, %arg1, %c0_i32_47 : i32
    %95 = arith.extui %94 : i1 to i32
    %c0_i32_48 = arith.constant 0 : i32
    %96 = arith.cmpi ne, %95, %c0_i32_48 : i32
    scf.if %96 {
      %c0_49 = arith.constant 0 : index
      %c0_50 = arith.constant 0 : index
      %97 = vector.load %arg12[%c0_49, %c0_50] : memref<1x16xf32, #tpu.memory_space<vmem>>, vector<1x16xf32>
      %98 = vector.shape_cast %97 : vector<1x16xf32> to vector<1x1x16xf32>
      %cst_51 = arith.constant dense<0.000000e+00> : vector<1xf32>
      %99 = vector.multi_reduction <add>, %98, %cst_51 [1, 2] : vector<1x1x16xf32> to vector<1xf32>
      %100 = vector.shape_cast %99 : vector<1xf32> to vector<1x1x1xf32>
      %101 = vector.extract %100[0, 0, 0] : f32 from vector<1x1x1xf32>
      %102 = vector.broadcast %101 : f32 to vector<1x8x128xf32>
      %c0_52 = arith.constant 0 : index
      %c0_53 = arith.constant 0 : index
      %c0_54 = arith.constant 0 : index
      %103 = vector.load %arg7[%c0_52, %c0_53, %c0_54] : memref<1x8x128xf32, #tpu.memory_space<vmem>>, vector<1x8x128xf32>
      tpu.vector_store %arg7[%c0_52, %c0_53, %c0_54], %102 {strides = array<i32>} : memref<1x8x128xf32, #tpu.memory_space<vmem>>, vector<1x8x128xf32>,
      %c0_55 = arith.constant 0 : index
      %c0_56 = arith.constant 0 : index
      %104 = vector.load %arg13[%c0_55, %c0_56] : memref<1x16xf32, #tpu.memory_space<vmem>>, vector<1x16xf32>
      %105 = vector.shape_cast %104 : vector<1x16xf32> to vector<1x1x16xf32>
      %cst_57 = arith.constant dense<0.000000e+00> : vector<1xf32>
      %106 = vector.multi_reduction <add>, %105, %cst_57 [1, 2] : vector<1x1x16xf32> to vector<1xf32>
      %107 = vector.shape_cast %106 : vector<1xf32> to vector<1x1x1xf32>
      %108 = vector.extract %107[0, 0, 0] : f32 from vector<1x1x1xf32>
      %109 = vector.broadcast %108 : f32 to vector<1x8x128xf32>
      %c0_58 = arith.constant 0 : index
      %c0_59 = arith.constant 0 : index
      %c0_60 = arith.constant 0 : index
      %110 = vector.load %arg8[%c0_58, %c0_59, %c0_60] : memref<1x8x128xf32, #tpu.memory_space<vmem>>, vector<1x8x128xf32>
      tpu.vector_store %arg8[%c0_58, %c0_59, %c0_60], %109 {strides = array<i32>} : memref<1x8x128xf32, #tpu.memory_space<vmem>>, vector<1x8x128xf32>,
      %c0_61 = arith.constant 0 : index
      %c0_62 = arith.constant 0 : index
      %111 = vector.load %arg14[%c0_61, %c0_62] : memref<1x16xf32, #tpu.memory_space<vmem>>, vector<1x16xf32>
      %112 = vector.shape_cast %111 : vector<1x16xf32> to vector<1x1x16xf32>
      %cst_63 = arith.constant dense<0.000000e+00> : vector<1xf32>
      %113 = vector.multi_reduction <add>, %112, %cst_63 [1, 2] : vector<1x1x16xf32> to vector<1xf32>
      %114 = vector.shape_cast %113 : vector<1xf32> to vector<1x1x1xf32>
      %115 = vector.extract %114[0, 0, 0] : f32 from vector<1x1x1xf32>
      %116 = vector.broadcast %115 : f32 to vector<1x8x128xf32>
      %c0_64 = arith.constant 0 : index
      %c0_65 = arith.constant 0 : index
      %c0_66 = arith.constant 0 : index
      %117 = vector.load %arg9[%c0_64, %c0_65, %c0_66] : memref<1x8x128xf32, #tpu.memory_space<vmem>>, vector<1x8x128xf32>
      tpu.vector_store %arg9[%c0_64, %c0_65, %c0_66], %116 {strides = array<i32>} : memref<1x8x128xf32, #tpu.memory_space<vmem>>, vector<1x8x128xf32>,
      %c0_67 = arith.constant 0 : index
      %c0_68 = arith.constant 0 : index
      %118 = vector.load %arg15[%c0_67, %c0_68] : memref<1x1xi32, #tpu.memory_space<vmem>>, vector<1x1xi32>
      %119 = vector.shape_cast %118 : vector<1x1xi32> to vector<1x1x1xi32>
      %cst_69 = arith.constant dense<0> : vector<1xi32>
      %120 = vector.multi_reduction <add>, %119, %cst_69 [1, 2] : vector<1x1x1xi32> to vector<1xi32>
      %121 = vector.shape_cast %120 : vector<1xi32> to vector<1x1x1xi32>
      %122 = vector.extract %121[0, 0, 0] : i32 from vector<1x1x1xi32>
      %123 = vector.broadcast %122 : i32 to vector<1x8x128xi32>
      %c0_70 = arith.constant 0 : index
      %c0_71 = arith.constant 0 : index
      %c0_72 = arith.constant 0 : index
      %124 = vector.load %arg10[%c0_70, %c0_71, %c0_72] : memref<1x8x128xi32, #tpu.memory_space<vmem>>, vector<1x8x128xi32>
      tpu.vector_store %arg10[%c0_70, %c0_71, %c0_72], %123 {strides = array<i32>} : memref<1x8x128xi32, #tpu.memory_space<vmem>>, vector<1x8x128xi32>,
      %c0_73 = arith.constant 0 : index
      %c0_74 = arith.constant 0 : index
      %125 = vector.load %arg16[%c0_73, %c0_74] : memref<1x8xf32, #tpu.memory_space<vmem>>, vector<1x8xf32>
      %126 = vector.shape_cast %125 : vector<1x8xf32> to vector<1x1x8xf32>
      %cst_75 = arith.constant dense<0.000000e+00> : vector<1xf32>
      %127 = vector.multi_reduction <add>, %126, %cst_75 [1, 2] : vector<1x1x8xf32> to vector<1xf32>
      %128 = vector.shape_cast %127 : vector<1xf32> to vector<1x1x1xf32>
      %129 = vector.extract %128[0, 0, 0] : f32 from vector<1x1x1xf32>
      %130 = vector.broadcast %129 : f32 to vector<1x8x128xf32>
      %c0_76 = arith.constant 0 : index
      %c0_77 = arith.constant 0 : index
      %c0_78 = arith.constant 0 : index
      %131 = vector.load %arg11[%c0_76, %c0_77, %c0_78] : memref<1x8x128xf32, #tpu.memory_space<vmem>>, vector<1x8x128xf32>
      tpu.vector_store %arg11[%c0_76, %c0_77, %c0_78], %130 {strides = array<i32>} : memref<1x8x128xf32, #tpu.memory_space<vmem>>, vector<1x8x128xf32>,
    } else {
    }
    return
  }
  func.func @transform_0(%arg0: i32, %arg1: i32) -> (i32, i32) {
    %c1_i32 = arith.constant 1 : i32
    %0 = arith.muli %arg0, %c1_i32 : i32
    %1 = arith.addi %0, %arg1 : i32
    %c0_i32 = arith.constant 0 : i32
    %c0_i32_0 = arith.constant 0 : i32
    return %1, %c0_i32 : i32, i32
  }
  func.func @transform_1(%arg0: i32, %arg1: i32) -> (i32, i32) {
    %c1_i32 = arith.constant 1 : i32
    %0 = arith.muli %arg0, %c1_i32 : i32
    %1 = arith.addi %0, %arg1 : i32
    %c0_i32 = arith.constant 0 : i32
    %c0_i32_0 = arith.constant 0 : i32
    return %1, %c0_i32 : i32, i32
  }
  func.func @transform_2(%arg0: i32, %arg1: i32) -> (i32, i32) {
    %c1_i32 = arith.constant 1 : i32
    %0 = arith.muli %arg0, %c1_i32 : i32
    %1 = arith.addi %0, %arg1 : i32
    %c0_i32 = arith.constant 0 : i32
    %c0_i32_0 = arith.constant 0 : i32
    return %1, %c0_i32 : i32, i32
  }
  func.func @transform_3(%arg0: i32, %arg1: i32) -> (i32, i32) {
    %c1_i32 = arith.constant 1 : i32
    %0 = arith.muli %arg0, %c1_i32 : i32
    %1 = arith.addi %0, %arg1 : i32
    %c0_i32 = arith.constant 0 : i32
    %c0_i32_0 = arith.constant 0 : i32
    return %c0_i32, %1 : i32, i32
  }
  func.func @transform_4(%arg0: i32, %arg1: i32) -> (i32, i32) {
    %c1_i32 = arith.constant 1 : i32
    %0 = arith.muli %arg0, %c1_i32 : i32
    %1 = arith.addi %0, %arg1 : i32
    %c0_i32 = arith.constant 0 : i32
    %c0_i32_0 = arith.constant 0 : i32
    return %c0_i32, %1 : i32, i32
  }
  func.func @transform_5(%arg0: i32, %arg1: i32) -> (i32, i32, i32) {
    %c0_i32 = arith.constant 0 : i32
    %c0_i32_0 = arith.constant 0 : i32
    %c0_i32_1 = arith.constant 0 : i32
    return %arg0, %c0_i32, %c0_i32_0 : i32, i32, i32
  }
  func.func @transform_6(%arg0: i32, %arg1: i32) -> (i32, i32, i32) {
    %c0_i32 = arith.constant 0 : i32
    %c0_i32_0 = arith.constant 0 : i32
    %c0_i32_1 = arith.constant 0 : i32
    return %arg0, %c0_i32, %c0_i32_0 : i32, i32, i32
  }
  func.func @transform_7(%arg0: i32, %arg1: i32) -> (i32, i32, i32) {
    %c0_i32 = arith.constant 0 : i32
    %c0_i32_0 = arith.constant 0 : i32
    %c0_i32_1 = arith.constant 0 : i32
    return %arg0, %c0_i32, %c0_i32_0 : i32, i32, i32
  }
  func.func @transform_8(%arg0: i32, %arg1: i32) -> (i32, i32, i32) {
    %c0_i32 = arith.constant 0 : i32
    %c0_i32_0 = arith.constant 0 : i32
    %c0_i32_1 = arith.constant 0 : i32
    return %arg0, %c0_i32, %c0_i32_0 : i32, i32, i32
  }
  func.func @transform_9(%arg0: i32, %arg1: i32) -> (i32, i32, i32) {
    %c0_i32 = arith.constant 0 : i32
    %c0_i32_0 = arith.constant 0 : i32
    %c0_i32_1 = arith.constant 0 : i32
    return %arg0, %c0_i32, %c0_i32_0 : i32, i32, i32
  }
}

</mosaic_0001>

<llo_original>
// kernel: tpu_custom_call.1
$region0: #{tpu_custom_call.1}
  #allocation0 [shape = 'u32[]', space=smem, size = 0x4, offset = 0x4, fixed_abs, tag = 'smem constant byte address 0x4 - core index']
  #allocation1 [shape = 'u32[72,128]{1,0:T(1,128)}', space=vmem, size = 0x9000, scoped, tag = 'internal scratch']
  #allocation2 [shape = 'f32[1,16]{1,0:T(1,128)}', space=vmem, size = 0x200, scoped, tag = 'scratch operand']
  #allocation3 [shape = 'f32[1,16]{1,0:T(1,128)}', space=vmem, size = 0x200, scoped, tag = 'scratch operand']
  #allocation4 [shape = 'f32[1,16]{1,0:T(1,128)}', space=vmem, size = 0x200, scoped, tag = 'scratch operand']
  #allocation5 [shape = 's32[1,1]{1,0:T(1,128)}', space=vmem, size = 0x200, scoped, tag = 'scratch operand']
  #allocation6 [shape = 'f32[1,8]{1,0:T(1,128)}', space=vmem, size = 0x200, scoped, tag = 'scratch operand']
  %s0 = inlined_call_operand.vmem [shape: f32[8,16], index: 0, kind: input, shape index: {}]
  %s1 = inlined_call_operand.hbm [shape: f32[8,16], index: 1, kind: input, shape index: {}]
  %s2 = inlined_call_operand.vmem [shape: s32[8,1], index: 2, kind: input, shape index: {}]
  %s3 = inlined_call_operand.vmem [shape: f32[1,8], index: 3, kind: input, shape index: {}]
  %s4 = inlined_call_operand.vmem [shape: f32[1,8], index: 4, kind: input, shape index: {}]
  %s5 = inlined_call_operand.hbm [shape: f32[1,8,128], index: 5, kind: output, shape index: {0}]
  %s6 = inlined_call_operand.hbm [shape: f32[1,8,128], index: 6, kind: output, shape index: {1}]
  %s7 = inlined_call_operand.hbm [shape: f32[1,8,128], index: 7, kind: output, shape index: {2}]
  %s8 = inlined_call_operand.hbm [shape: s32[1,8,128], index: 8, kind: output, shape index: {3}]
  %s9 = inlined_call_operand.hbm [shape: f32[1,8,128], index: 9, kind: output, shape index: {4}]
  %10 = xla_tuple %s5, %s6, %s7, %s8, %s9
  %s11 = sld [smem:[#allocation0]]
  $region74: #{tpu_custom_call.1} parent=0
    _
  %s13 = ssub.s32 1, %s11
  %s14 = scalar_select 0, %s13, %s11
  $region1: #{tpu_custom_call.1} parent=0
    #allocation7 [shape = 'u8[4096]{0}', space=vmem, size = 0x1000, scoped, tag = 'input window, operand 1, single buffered']
    #allocation8 [shape = 's32[1]{0}', space=sflag, size = 0x4, scoped, tag = 'scoped memory for tpu_custom_call.1']
    #allocation9 [shape = 's32[1]{0}', space=sflag, size = 0x4, scoped, tag = 'scoped memory for tpu_custom_call.1']
    #allocation10 [shape = 'u8[4096]{0}', space=vmem, size = 0x1000, scoped, tag = 'output window, operand 0, single buffered']
    #allocation11 [shape = 'u8[4096]{0}', space=vmem, size = 0x1000, scoped, tag = 'output window, operand 1, single buffered']
    #allocation12 [shape = 's32[1]{0}', space=sflag, size = 0x4, scoped, tag = 'scoped memory for tpu_custom_call.1']
    #allocation13 [shape = 'u8[4096]{0}', space=vmem, size = 0x1000, scoped, tag = 'output window, operand 2, single buffered']
    #allocation14 [shape = 'u8[4096]{0}', space=vmem, size = 0x1000, scoped, tag = 'output window, operand 3, single buffered']
    #allocation15 [shape = 's32[1]{0}', space=sflag, size = 0x4, scoped, tag = 'scoped memory for tpu_custom_call.1']
    #allocation16 [shape = 'u8[4096]{0}', space=vmem, size = 0x1000, scoped, tag = 'output window, operand 4, single buffered']
    %15 = vsyncpa [#allocation8], 0
    %16 = vsyncpa [#allocation9], 0
    %17 = vsyncpa [#allocation12], 0
    %18 = vsyncpa [#allocation15], 0
    // Predicated region
    $region2: #{tpu_custom_call.1} parent=1 // pred_check
      _
    $region3: #{tpu_custom_call.1} parent=1 // pred_check_branch
      %20 = sbr.rel (0) target = $region5
    $region4: #{tpu_custom_call.1} parent=1 // pred_region
      %s21 = sadd.s32 0, 0
      %p22 = scmp.lt.s32.totalorder %s21, 0
      %s23 = scalar_select %p22, %s21, 0
      %s24 = smul.addr %s23, 8
      %s25 = scalar_lea.vmem %s0, %s24
      %s26 = sadd.s32 0, 0
    $region5: #{tpu_custom_call.1} parent=1 // pred_fallthru
      _
    // Predicated region
    $region6: #{tpu_custom_call.1} parent=1 // pred_check
      _
    $region7: #{tpu_custom_call.1} parent=1 // pred_check_branch
      %28 = sbr.rel (0) target = $region9
    $region8: #{tpu_custom_call.1} parent=1 // pred_region
      %s29 = sadd.s32 0, 0
      %31 = vsyncadd [#allocation8], 0
      %s32 = smul.addr %s29, 8
      %s33 = scalar_lea.hbm %s1, %s32
      %s35 = sshll.u32 %s33, 4
      %s36 = int_to_ptr.hbm [resolvable:$true] %s35
      %s37 = sshll.u32 [#allocation7], 4
      %s38 = int_to_ptr.vmem [resolvable:$true] %s37
      %40 = dma.hbm_to_vmem [thread:$0]  %s36, 128, %s38, [#allocation8]
    $region9: #{tpu_custom_call.1} parent=1 // pred_fallthru
      _
    // Predicated region
    $region10: #{tpu_custom_call.1} parent=1 // pred_check
      _
    $region11: #{tpu_custom_call.1} parent=1 // pred_check_branch
      %42 = sbr.rel (0) target = $region13
    $region12: #{tpu_custom_call.1} parent=1 // pred_region
      %s43 = sadd.s32 0, 0
      %p44 = scmp.lt.s32.totalorder %s43, 0
      %s45 = scalar_select %p44, %s43, 0
      %s46 = smul.addr %s45, 8
      %s47 = scalar_lea.vmem %s2, %s46
      %s48 = sadd.s32 0, 0
    $region13: #{tpu_custom_call.1} parent=1 // pred_fallthru
      _
    // Predicated region
    $region14: #{tpu_custom_call.1} parent=1 // pred_check
      _
    $region15: #{tpu_custom_call.1} parent=1 // pred_check_branch
      %50 = sbr.rel (0) target = $region17
    $region16: #{tpu_custom_call.1} parent=1 // pred_region
      %s51 = sadd.s32 0, 0
      %p52 = scmp.lt.s32.totalorder %s51, 0
      %s53 = scalar_select %p52, %s51, 0
      %s54 = scalar_lea.vmem %s3, %s53
      %s55 = sadd.s32 0, 0
    $region17: #{tpu_custom_call.1} parent=1 // pred_fallthru
      _
    // Predicated region
    $region18: #{tpu_custom_call.1} parent=1 // pred_check
      _
    $region19: #{tpu_custom_call.1} parent=1 // pred_check_branch
      %57 = sbr.rel (0) target = $region21
    $region20: #{tpu_custom_call.1} parent=1 // pred_region
      %s58 = sadd.s32 0, 0
      %p59 = scmp.lt.s32.totalorder %s58, 0
      %s60 = scalar_select %p59, %s58, 0
      %s61 = scalar_lea.vmem %s4, %s60
      %s62 = sadd.s32 0, 0
    $region21: #{tpu_custom_call.1} parent=1 // pred_fallthru
      _
    // Predicated region
    $region22: #{tpu_custom_call.1} parent=1 // pred_check
      _
    $region23: #{tpu_custom_call.1} parent=1 // pred_check_branch
      %64 = sbr.rel (0) target = $region25
    $region24: #{tpu_custom_call.1} parent=1 // pred_region
      %66 = dma.done [#allocation8], 128
    $region25: #{tpu_custom_call.1} parent=1 // pred_fallthru
      _
    %s67 = sadd.s32 0, 0
    %p68 = scmp.lt.s32.totalorder %s67, 0
    %s69 = scalar_select %p68, %s67, 0
    %s70 = smul.addr %s69, 8
    %s71 = scalar_lea.vmem %s0, %s70
    %s72 = sadd.s32 0, 0
    %p73 = scmp.lt.s32.totalorder %s72, 0
    %s74 = scalar_select %p73, %s72, 0
    %s75 = smul.addr %s74, 8
    %s76 = scalar_lea.vmem %s2, %s75
    %s77 = sadd.s32 0, 0
    %p78 = scmp.lt.s32.totalorder %s77, 0
    %s79 = scalar_select %p78, %s77, 0
    %s80 = scalar_lea.vmem %s3, %s79
    %s81 = sadd.s32 0, 0
    %p82 = scmp.lt.s32.totalorder %s81, 0
    %s83 = scalar_select %p82, %s81, 0
    %s84 = scalar_lea.vmem %s4, %s83
    %s85 = sadd.s32 0, 0
    %p86 = scmp.lt.s32.totalorder %s85, 0
    %s87 = scalar_select %p86, %s85, 0
    %s88 = smul.addr %s87, 8
    %s89 = scalar_lea.vmem %s0, %s88
    %s90 = sadd.s32 0, 0
    %s91 = sadd.s32 0, 0
    %s92 = sadd.s32 0, 0
    %p93 = scmp.lt.s32.totalorder %s92, 0
    %s94 = scalar_select %p93, %s92, 0
    %s95 = smul.addr %s94, 8
    %s96 = scalar_lea.vmem %s2, %s95
    %s97 = sadd.s32 0, 0
    %s98 = sadd.s32 0, 0
    %p99 = scmp.lt.s32.totalorder %s98, 0
    %s100 = scalar_select %p99, %s98, 0
    %s101 = scalar_lea.vmem %s3, %s100
    %s102 = sadd.s32 0, 0
    %s103 = sadd.s32 0, 0
    %p104 = scmp.lt.s32.totalorder %s103, 0
    %s105 = scalar_select %p104, %s103, 0
    %s106 = scalar_lea.vmem %s4, %s105
    %s107 = sadd.s32 0, 0
    %p108 = scmp.eq.s32.totalorder 0, 0
    // Predicated region
    $region26: #{tpu_custom_call.1} parent=1 // pred_check
      %p109 = pneg %p108
    $region27: #{tpu_custom_call.1} parent=1 // pred_check_branch
      %111 = sbr.rel (%p109) target = $region29
    $region28: #{tpu_custom_call.1} parent=1 // pred_region
      %vm112 = vcmask 122880
      %113 = vst.msk [vmem:[#allocation2] sm:$0x1] %vm112, 0.0
      %114 = vst.msk [vmem:[#allocation3] sm:$0x1] %vm112, 0.0
      %115 = vst.msk [vmem:[#allocation4] sm:$0x1] %vm112, 0.0
      %vm116 = vcmask 0
      %117 = vst.msk [vmem:[#allocation5] sm:$0x1] %vm116, 0
      %vm118 = vcmask 57344
      %119 = vst.msk [vmem:[#allocation6] sm:$0x1] %vm118, 0.0
    $region29: #{tpu_custom_call.1} parent=1 // pred_fallthru
      _
    %v120 = vld [vmem:[%s89] sm:$0xff]
    %v121 = vld [vmem:[#allocation7] sm:$0xff]
    %v122 = vld [vmem:[%s96] sm:$0xff]
    %v123 = vld [vmem:[%s101] sm:$0x1]
    %v124 = vld [vmem:[%s106] sm:$0x1]
    %s125 = sadd.s32 0, 0
    %s126 = smul.u32 %s125, 8
    %v127 = vlaneseq
    %v128 = vshrl.u32 %v127, 7
    %v129 = vstv %s126
    %v130 = vadd.s32 %v129, %v128
    %vm131 = vcmp.lt.s32.totalorder %v130, 8
    %v132 = vlaneseq
    %v133 = vand.u32 %v132, 127
    %vm134 = vcmask 130048
    %v135 = vsel %vm134, %v120, -inf
    %136 = vmax.xlane.f32.xlu0 %v135
    %v137 = vpop.xlane.xlu0 %136
    %v138 = vsub.f32 %v120, %v137
    %v139 = vmul.f32 %v138, 1.442695
    %v140 = vpow.pop %v139
    %v141 = vsel %vm134, %v140, 0.0
    %142 = vadd.xlane.f32.xlu0 %v141
    %v143 = vpop.xlane.xlu0 %142
    %v144 = vlog2.pop %v143
    %v145 = vmul.f32 %v144, 0.6931472
    %v146 = vadd.f32 %v137, %v145
    %v147 = vsub.f32 %v146, %v120
    %v148 = vsel %vm134, %v121, -inf
    %149 = vmax.xlane.f32.xlu0 %v148
    %v150 = vpop.xlane.xlu0 %149
    %vm151 = vcmp.eq.f32.partialorder %v121, %v150
    %v152 = vsel %vm151, %v133, 16
    %v153 = vsel %vm134, %v152, 2147483647
    %v154 = vand.u32 %v153, 65535
    %v155 = vshra.s32 %v153, 16
    %v156 = vcvt.s32.f32 %v154
    %v157 = vcvt.s32.f32 %v155
    %158 = vmin.xlane.f32.xlu0 %v157
    %v159 = vpop.xlane.xlu0 %158
    %vm160 = vcmp.eq.f32.partialorder %v157, %v159
    %v161 = vsel %vm160, %v156, inf
    %162 = vmin.xlane.f32.xlu0 %v161
    %v163 = vpop.xlane.xlu0 %162
    %v164 = vcvt.f32.s32 %v163
    %v165 = vcvt.f32.s32 %v159
    %v166 = vshll.u32 %v165, 16
    %v167 = vadd.s32 %v166, %v164
    %vm168 = vcmp.eq.s32.totalorder %v133, %v167
    %vm169 = vcmp.eq.s32.totalorder %v167, %v122
    %v170 = vsel %vm169, 1, 0
    %171 = vset.pattern.permute.xlu0 0
    %172 = vperm.xlu0 %171, %v170
    %v173 = vpop.permute.xlu0 %172
    %vm174 = vcmp.eq.s32.totalorder %v173, 1
    %vm175 = vmand %vm168, %vm174
    %v176 = vsel %vm131, 1, 0
    %vm177 = vcmp.eq.s32.totalorder %v176, 1
    %vm178 = vmand %vm175, %vm177
    %v179 = vld [vmem:[#allocation2] sm:$0x1]
    %v180 = vsel %vm178, %v147, 0.0
    %v181 = vsel %vm134, %v180, 0.0
    %v182 = vrot.slane %v181, 4
    %v183 = vadd.f32 %v181, %v182
    %v184 = vrot.slane %v183, 2
    %v185 = vadd.f32 %v183, %v184
    %v186 = vrot.slane %v185, 1
    %v187 = vadd.f32 %v185, %v186
    %v188 = vadd.f32 %v179, %v187
    %vm189 = vcmask 122880
    %190 = vst.msk [vmem:[#allocation2] sm:$0x1] %vm189, %v188
    %v191 = vld [vmem:[#allocation3] sm:$0x1]
    %v192 = vsel %vm178, 1.0, 0.0
    %v193 = vsel %vm134, %v192, 0.0
    %v194 = vrot.slane %v193, 4
    %v195 = vadd.f32 %v193, %v194
    %v196 = vrot.slane %v195, 2
    %v197 = vadd.f32 %v195, %v196
    %v198 = vrot.slane %v197, 1
    %v199 = vadd.f32 %v197, %v198
    %v200 = vadd.f32 %v191, %v199
    %201 = vst.msk [vmem:[#allocation3] sm:$0x1] %vm189, %v200
    %v202 = vld [vmem:[#allocation4] sm:$0x1]
    %v203 = vmul.f32 %v121, %v147
    %v204 = vsel %vm177, %v203, 0.0
    %v205 = vsel %vm134, %v204, 0.0
    %v206 = vrot.slane %v205, 4
    %v207 = vadd.f32 %v205, %v206
    %v208 = vrot.slane %v207, 2
    %v209 = vadd.f32 %v207, %v208
    %v210 = vrot.slane %v209, 1
    %v211 = vadd.f32 %v209, %v210
    %v212 = vadd.f32 %v202, %v211
    %213 = vst.msk [vmem:[#allocation4] sm:$0x1] %vm189, %v212
    %v214 = vld [vmem:[#allocation5] sm:$0x1]
    %v215 = vsel %vm131, %v122, 0
    %vm216 = vcmask 7168
    %v217 = vsel %vm216, %v215, 0
    %v218 = vand.u32 %v217, 65535
    %v219 = vshrl.u32 %v217, 16
    %v220 = vcvt.s32.f32 %v218
    %v221 = vcvt.s32.f32 %v219
    %222 = vadd.xlane.f32.xlu0 %v220
    %v223 = vpop.xlane.xlu0 %222
    %224 = vadd.xlane.f32.xlu0 %v221
    %v225 = vpop.xlane.xlu0 %224
    %v226 = vcvt.f32.s32 %v223
    %v227 = vcvt.f32.s32 %v225
    %v228 = vshll.u32 %v227, 16
    %v229 = vadd.s32 %v228, %v226
    %v230 = vrot.slane %v229, 4
    %v231 = vadd.s32 %v229, %v230
    %v232 = vrot.slane %v231, 2
    %v233 = vadd.s32 %v231, %v232
    %v234 = vrot.slane %v233, 1
    %v235 = vadd.s32 %v233, %v234
    %s236 = vtos %v235
    %v237 = vstv %s236
    %v238 = vadd.s32 %v214, %v237
    %vm239 = vcmask 0
    %240 = vst.msk [vmem:[#allocation5] sm:$0x1] %vm239, %v238
    %v241 = vadd.s32 %v129, %v133
    %vm242 = vcmp.lt.s32.totalorder %v241, 8
    %v243 = vtanh.pop %v123
    %v244 = vsub.f32 %v243, %v124
    %v245 = vld [vmem:[#allocation6] sm:$0x1]
    %v246 = vmul.f32 %v244, %v244
    %v247 = vsel %vm242, %v246, 0.0
    %v248 = vadd.f32 %v245, %v247
    %vm249 = vcmask 57344
    %250 = vst.msk [vmem:[#allocation6] sm:$0x1] %vm249, %v248
    // Predicated region
    $region30: #{tpu_custom_call.1} parent=1 // pred_check
      %p251 = pneg %p108
    $region31: #{tpu_custom_call.1} parent=1 // pred_check_branch
      %253 = sbr.rel (%p251) target = $region33
    $region32: #{tpu_custom_call.1} parent=1 // pred_region
      %v254 = vld [vmem:[#allocation2] sm:$0x1]
      %v255 = vsel %vm189, %v254, 0.0
      %256 = vadd.xlane.f32.xlu0 %v255
      %v257 = vpop.xlane.xlu0 %256
      %v258 = vrot.slane %v257, 4
      %v259 = vadd.f32 %v257, %v258
      %v260 = vrot.slane %v259, 2
      %v261 = vadd.f32 %v259, %v260
      %v262 = vrot.slane %v261, 1
      %v263 = vadd.f32 %v261, %v262
      %s264 = vtos %v263
      %v265 = vstv %s264
      %266 = vst [vmem:[#allocation10] sm:$0xff] %v265
      %v267 = vld [vmem:[#allocation3] sm:$0x1]
      %v268 = vsel %vm189, %v267, 0.0
      %269 = vadd.xlane.f32.xlu0 %v268
      %v270 = vpop.xlane.xlu0 %269
      %v271 = vrot.slane %v270, 4
      %v272 = vadd.f32 %v270, %v271
      %v273 = vrot.slane %v272, 2
      %v274 = vadd.f32 %v272, %v273
      %v275 = vrot.slane %v274, 1
      %v276 = vadd.f32 %v274, %v275
      %s277 = vtos %v276
      %v278 = vstv %s277
      %279 = vst [vmem:[#allocation11] sm:$0xff] %v278
      %v280 = vld [vmem:[#allocation4] sm:$0x1]
      %v281 = vsel %vm189, %v280, 0.0
      %282 = vadd.xlane.f32.xlu0 %v281
      %v283 = vpop.xlane.xlu0 %282
      %v284 = vrot.slane %v283, 4
      %v285 = vadd.f32 %v283, %v284
      %v286 = vrot.slane %v285, 2
      %v287 = vadd.f32 %v285, %v286
      %v288 = vrot.slane %v287, 1
      %v289 = vadd.f32 %v287, %v288
      %s290 = vtos %v289
      %v291 = vstv %s290
      %292 = vst [vmem:[#allocation13] sm:$0xff] %v291
      %v293 = vld [vmem:[#allocation5] sm:$0x1]
      %s294 = vtos %v293
      %v295 = vstv %s294
      %296 = vst [vmem:[#allocation14] sm:$0xff] %v295
      %v297 = vld [vmem:[#allocation6] sm:$0x1]
      %v298 = vsel %vm249, %v297, 0.0
      %299 = vadd.xlane.f32.xlu0 %v298
      %v300 = vpop.xlane.xlu0 %299
      %v301 = vrot.slane %v300, 4
      %v302 = vadd.f32 %v300, %v301
      %v303 = vrot.slane %v302, 2
      %v304 = vadd.f32 %v302, %v303
      %v305 = vrot.slane %v304, 1
      %v306 = vadd.f32 %v304, %v305
      %s307 = vtos %v306
      %v308 = vstv %s307
      %309 = vst [vmem:[#allocation16] sm:$0xff] %v308
    $region33: #{tpu_custom_call.1} parent=1 // pred_fallthru
      _
    // Predicated region
    $region34: #{tpu_custom_call.1} parent=1 // pred_check
      _
    $region35: #{tpu_custom_call.1} parent=1 // pred_check_branch
      %311 = sbr.rel (0) target = $region37
    $region36: #{tpu_custom_call.1} parent=1 // pred_region
      %313 = vsyncadd [#allocation9], 0
      %s315 = sshll.u32 [#allocation10], 4
      %s316 = int_to_ptr.vmem [resolvable:$true] %s315
      %s317 = sshll.u32 %s5, 4
      %s318 = int_to_ptr.hbm [resolvable:$true] %s317
      %320 = dma.vmem_to_hbm [thread:$0]  %s316, 128, %s318, [#allocation9]
    $region37: #{tpu_custom_call.1} parent=1 // pred_fallthru
      _
    // Predicated region
    $region38: #{tpu_custom_call.1} parent=1 // pred_check
      _
    $region39: #{tpu_custom_call.1} parent=1 // pred_check_branch
      %322 = sbr.rel (0) target = $region41
    $region40: #{tpu_custom_call.1} parent=1 // pred_region
      %324 = vsyncadd [#allocation12], 0
      %s326 = sshll.u32 [#allocation11], 4
      %s327 = int_to_ptr.vmem [resolvable:$true] %s326
      %s328 = sshll.u32 %s6, 4
      %s329 = int_to_ptr.hbm [resolvable:$true] %s328
      %331 = dma.vmem_to_hbm [thread:$0]  %s327, 128, %s329, [#allocation12]
    $region41: #{tpu_custom_call.1} parent=1 // pred_fallthru
      _
    // Predicated region
    $region42: #{tpu_custom_call.1} parent=1 // pred_check
      _
    $region43: #{tpu_custom_call.1} parent=1 // pred_check_branch
      %333 = sbr.rel (0) target = $region45
    $region44: #{tpu_custom_call.1} parent=1 // pred_region
      %335 = vsyncadd [#allocation12], 0
      %s337 = sshll.u32 [#allocation13], 4
      %s338 = int_to_ptr.vmem [resolvable:$true] %s337
      %s339 = sshll.u32 %s7, 4
      %s340 = int_to_ptr.hbm [resolvable:$true] %s339
      %342 = dma.vmem_to_hbm [thread:$0]  %s338, 128, %s340, [#allocation12]
    $region45: #{tpu_custom_call.1} parent=1 // pred_fallthru
      _
    // Predicated region
    $region46: #{tpu_custom_call.1} parent=1 // pred_check
      _
    $region47: #{tpu_custom_call.1} parent=1 // pred_check_branch
      %344 = sbr.rel (0) target = $region49
    $region48: #{tpu_custom_call.1} parent=1 // pred_region
      %346 = vsyncadd [#allocation15], 0
      %s348 = sshll.u32 [#allocation14], 4
      %s349 = int_to_ptr.vmem [resolvable:$true] %s348
      %s350 = sshll.u32 %s8, 4
      %s351 = int_to_ptr.hbm [resolvable:$true] %s350
      %353 = dma.vmem_to_hbm [thread:$0]  %s349, 128, %s351, [#allocation15]
    $region49: #{tpu_custom_call.1} parent=1 // pred_fallthru
      _
    // Predicated region
    $region50: #{tpu_custom_call.1} parent=1 // pred_check
      _
    $region51: #{tpu_custom_call.1} parent=1 // pred_check_branch
      %355 = sbr.rel (0) target = $region53
    $region52: #{tpu_custom_call.1} parent=1 // pred_region
      %357 = vsyncadd [#allocation15], 0
      %s359 = sshll.u32 [#allocation16], 4
      %s360 = int_to_ptr.vmem [resolvable:$true] %s359
      %s361 = sshll.u32 %s9, 4
      %s362 = int_to_ptr.hbm [resolvable:$true] %s361
      %364 = dma.vmem_to_hbm [thread:$0]  %s360, 128, %s362, [#allocation15]
    $region53: #{tpu_custom_call.1} parent=1 // pred_fallthru
      _
    // Predicated region
    $region54: #{tpu_custom_call.1} parent=1 // pred_check
      _
    $region55: #{tpu_custom_call.1} parent=1 // pred_check_branch
      %366 = sbr.rel (0) target = $region57
    $region56: #{tpu_custom_call.1} parent=1 // pred_region
      %368 = dma.done [#allocation9], 128
    $region57: #{tpu_custom_call.1} parent=1 // pred_fallthru
      _
    // Predicated region
    $region58: #{tpu_custom_call.1} parent=1 // pred_check
      _
    $region59: #{tpu_custom_call.1} parent=1 // pred_check_branch
      %370 = sbr.rel (0) target = $region61
    $region60: #{tpu_custom_call.1} parent=1 // pred_region
      %372 = dma.done [#allocation12], 128
    $region61: #{tpu_custom_call.1} parent=1 // pred_fallthru
      _
    // Predicated region
    $region62: #{tpu_custom_call.1} parent=1 // pred_check
      _
    $region63: #{tpu_custom_call.1} parent=1 // pred_check_branch
      %374 = sbr.rel (0) target = $region65
    $region64: #{tpu_custom_call.1} parent=1 // pred_region
      %376 = dma.done [#allocation12], 128
    $region65: #{tpu_custom_call.1} parent=1 // pred_fallthru
      _
    // Predicated region
    $region66: #{tpu_custom_call.1} parent=1 // pred_check
      _
    $region67: #{tpu_custom_call.1} parent=1 // pred_check_branch
      %378 = sbr.rel (0) target = $region69
    $region68: #{tpu_custom_call.1} parent=1 // pred_region
      %380 = dma.done [#allocation15], 128
    $region69: #{tpu_custom_call.1} parent=1 // pred_fallthru
      _
    // Predicated region
    $region70: #{tpu_custom_call.1} parent=1 // pred_check
      _
    $region71: #{tpu_custom_call.1} parent=1 // pred_check_branch
      %382 = sbr.rel (0) target = $region73
    $region72: #{tpu_custom_call.1} parent=1 // pred_region
      %384 = dma.done [#allocation15], 128
    $region73: #{tpu_custom_call.1} parent=1 // pred_fallthru
      _
    %385 = vsyncpa [#allocation8], 1
    %386 = vsyncpa [#allocation9], 1
    %387 = vsyncpa [#allocation12], 1
    %388 = vsyncpa [#allocation15], 1

</llo_original>
